<compile_context>
chip_gen: v6e
topology: v6e:2x2x1
jax: 0.10.0
libtpu: 0.0.40
codegen_flags: <defaults>
</compile_context>

<pallas_src>
import functools
import numpy as np
import jax
import jax.numpy as jnp
from jax.experimental import pallas as pl
from jax.experimental.pallas import tpu as pltpu


# ----------------------------------------------------------------------------
# Fused Pallas kernel:
#   conv1 -> relu -> (dropout=id) -> conv2 -> residual -> Linear -> log_softmax
# ----------------------------------------------------------------------------
def gin_lin_skip_kernel(x_ref, adj_ref,
                        w11_ref, b11_ref, w12_ref, b12_ref,   # conv1 MLP
                        w21_ref, b21_ref, w22_ref, b22_ref,   # conv2 MLP
                        lw_ref, lb_ref,                       # head Linear
                        out_ref, *, eps1, eps2):
    f32 = jnp.float32
    x = x_ref[...].astype(f32)
    adj = adj_ref[...].astype(f32)

    def gin_conv(h, eps, w1_ref, b1_ref, w2_ref, b2_ref):
        # (1 + eps) * h_i + sum_{j in N(i)} h_j  -- neighbor sum on the MXU,
        # self term stays on the VPU (hides under MXU slack, avoids a second
        # N x N adjacency DMA for the general eps1 != eps2 case).
        agg = (1.0 + eps) * h + jnp.dot(adj, h, preferred_element_type=f32)
        t = jnp.dot(agg, w1_ref[...], preferred_element_type=f32) + b1_ref[...]
        t = jnp.maximum(t, 0.0)                               # MLP inner ReLU
        return jnp.dot(t, w2_ref[...], preferred_element_type=f32) + b2_ref[...]

    # x = F.relu(conv1(x, edge_index))
    h1 = jnp.maximum(gin_conv(x, eps1, w11_ref, b11_ref, w12_ref, b12_ref), 0.0)

    # x1 = F.dropout(x, training=False)  -> identity in eval mode.
    # x1 = conv2(x1, edge_index)
    h2 = gin_conv(h1, eps2, w21_ref, b21_ref, w22_ref, b22_ref)

    # x = x + x1 ; x = F.log_softmax(linear(x))  (dim=-1 for 2-D input)
    h = h1 + h2
    logits = jnp.dot(h, lw_ref[...], preferred_element_type=f32) + lb_ref[...]
    m = jnp.max(logits, axis=-1, keepdims=True)               # XLU lane reduce
    z = logits - m
    lse = jnp.log(jnp.sum(jnp.exp(z), axis=-1, keepdims=True))  # EUP exp/log
    out_ref[...] = z - lse


# ----------------------------------------------------------------------------
# Wrapper
# ----------------------------------------------------------------------------
def _vmem_specs(n):
    return [pl.BlockSpec(memory_space=pltpu.MemorySpace.VMEM) for _ in range(n)]


def _cost_estimate(n, f, h, c, n_inputs_bytes):
    # MXU flops (2*M*K*N per matmul): neighbor sums + 2 MLP layers per conv + head.
    flops = 2 * (n * n * f + n * f * h + n * h * h      # conv1
                 + n * n * h + n * h * h + n * h * h    # conv2
                 + n * h * c)                            # head Linear
    transcendentals = n * (c + 1)                        # exp + log per row
    bytes_accessed = n_inputs_bytes + n * c * 4
    return pl.CostEstimate(flops=flops, transcendentals=transcendentals,
                           bytes_accessed=bytes_accessed)


@functools.partial(jax.jit, static_argnames=("eps1", "eps2"))
def _gin_lin_skip_pallas(x, adj, p1, p2, lin_w, lin_b, *, eps1, eps2):
    n, f = x.shape
    h = lin_w.shape[0]
    c = lin_w.shape[1]
    args = (x, adj,
            p1["w1"], p1["b1"], p1["w2"], p1["b2"],
            p2["w1"], p2["b1"], p2["w2"], p2["b2"],
            lin_w, lin_b)
    in_bytes = sum(int(np.prod(a.shape)) * 4 for a in args)
    kernel = functools.partial(gin_lin_skip_kernel, eps1=eps1, eps2=eps2)
    return pl.pallas_call(
        kernel,
        out_shape=jax.ShapeDtypeStruct((n, c), jnp.float32),
        in_specs=_vmem_specs(len(args)),
        out_specs=pl.BlockSpec(memory_space=pltpu.MemorySpace.VMEM),
        cost_estimate=_cost_estimate(n, f, h, c, in_bytes),
    )(*args)


def gin_lin_skip_forward(x, edge_index, adj, p1, p2, lin_w, lin_b,
                         *, eps1=0.0, eps2=0.0):
    out = _gin_lin_skip_pallas(x, adj, p1, p2, lin_w, lin_b,
                               eps1=float(eps1), eps2=float(eps2))
    return out, edge_index


# ----------------------------------------------------------------------------
# Deterministic parameter / graph construction
# ----------------------------------------------------------------------------
def _uniform_linear(key, fan_in, fan_out):
    # PyTorch nn.Linear default: U(-1/sqrt(fan_in), 1/sqrt(fan_in)).
    bound = 1.0 / np.sqrt(fan_in)
    return jax.random.uniform(key, (fan_in, fan_out), jnp.float32, -bound, bound)


def make_gin_params(key, f_in, f_out):
    k1, k2 = jax.random.split(key, 2)
    return {
        "w1": _uniform_linear(k1, f_in, f_out),
        "b1": jnp.zeros((1, f_out), jnp.float32),
        "w2": _uniform_linear(k2, f_out, f_out),
        "b2": jnp.zeros((1, f_out), jnp.float32),
    }


def build_adjacency(edge_index, n):
    # adj[dst, src] = 1  (message from source j to target i); NO self loops --
    # GINConv handles the self term via (1 + eps) * x_i.
    adj = np.zeros((n, n), np.float32)
    src = np.asarray(edge_index[0])
    dst = np.asarray(edge_index[1])
    adj[dst, src] = 1.0
    return jnp.asarray(adj)


# ----------------------------------------------------------------------------
# Main
# ----------------------------------------------------------------------------
if __name__ == "__main__":
    N_NODES = 16
    NUM_FEATURES = 8
    HIDDEN = 32
    NUM_CLASSES = 4

    key = jax.random.PRNGKey(0)
    kx, k1, k2, k3 = jax.random.split(key, 4)

    # Node features.
    x = jax.random.normal(kx, (N_NODES, NUM_FEATURES), jnp.float32)

    # Ring graph, both directions: edge_index shape [2, 2N].
    src = np.concatenate([np.arange(N_NODES), (np.arange(N_NODES) + 1) % N_NODES])
    dst = np.concatenate([(np.arange(N_NODES) + 1) % N_NODES, np.arange(N_NODES)])
    edge_index = jnp.asarray(np.stack([src, dst]), jnp.int32)
    adj = build_adjacency(edge_index, N_NODES)

    # Parameters.
    p1 = make_gin_params(k1, NUM_FEATURES, HIDDEN)
    p2 = make_gin_params(k2, HIDDEN, HIDDEN)
    lin_w = _uniform_linear(k3, HIDDEN, NUM_CLASSES)
    lin_b = jnp.zeros((1, NUM_CLASSES), jnp.float32)

    out, ei = gin_lin_skip_forward(x, edge_index, adj, p1, p2, lin_w, lin_b)
    out = jax.block_until_ready(out)

    # Reference check in plain JAX (same math, no Pallas).
    def ref_forward(x):
        def conv(h, p):
            agg = h + adj @ h
            t = jnp.maximum(agg @ p["w1"] + p["b1"], 0.0)
            return t @ p["w2"] + p["b2"]
        h1 = jnp.maximum(conv(x, p1), 0.0)
        h2 = conv(h1, p2)
        logits = (h1 + h2) @ lin_w + lin_b
        return jax.nn.log_softmax(logits, axis=-1)

    ref = np.asarray(ref_forward(x))
    got = np.asarray(out)
    assert got.shape == (N_NODES, NUM_CLASSES)
    assert np.allclose(got, ref, atol=1e-4, rtol=1e-4), np.abs(got - ref).max()
    # log_softmax rows should sum (in prob space) to 1.
    assert np.allclose(np.exp(got).sum(axis=-1), 1.0, atol=1e-4)

    print("KERNEL_OK")
</pallas_src>

<mosaic_0001>
module attributes {stable_mosaic.version = 11 : i64} {
  func.func @gin_lin_skip_kernel(%arg0: memref<16x8xf32, #tpu.memory_space<vmem>>, %arg1: memref<16x16xf32, #tpu.memory_space<vmem>>, %arg2: memref<8x32xf32, #tpu.memory_space<vmem>>, %arg3: memref<1x32xf32, #tpu.memory_space<vmem>>, %arg4: memref<32x32xf32, #tpu.memory_space<vmem>>, %arg5: memref<1x32xf32, #tpu.memory_space<vmem>>, %arg6: memref<32x32xf32, #tpu.memory_space<vmem>>, %arg7: memref<1x32xf32, #tpu.memory_space<vmem>>, %arg8: memref<32x32xf32, #tpu.memory_space<vmem>>, %arg9: memref<1x32xf32, #tpu.memory_space<vmem>>, %arg10: memref<32x4xf32, #tpu.memory_space<vmem>>, %arg11: memref<1x4xf32, #tpu.memory_space<vmem>>, %arg12: memref<16x4xf32, #tpu.memory_space<vmem>>) attributes {dimension_semantics = [], scalar_prefetch = 0 : i64, scratch_operands = 0 : i64, tpu.core_type = #tpu.core_type<tc>} {
    %c0 = arith.constant 0 : index
    %c0_0 = arith.constant 0 : index
    %0 = vector.load %arg0[%c0, %c0_0] : memref<16x8xf32, #tpu.memory_space<vmem>>, vector<16x8xf32>
    %c0_1 = arith.constant 0 : index
    %c0_2 = arith.constant 0 : index
    %1 = vector.load %arg1[%c0_1, %c0_2] : memref<16x16xf32, #tpu.memory_space<vmem>>, vector<16x16xf32>
    %cst = arith.constant 1.000000e+00 : f32
    %2 = vector.broadcast %cst : f32 to vector<16x8xf32>
    %3 = arith.mulf %2, %0 : vector<16x8xf32>
    %cst_3 = arith.constant dense<0.000000e+00> : vector<16x8xf32>
    %4 = tpu.matmul %1, %0, %cst_3 {dimension_numbers = #tpu.dot_dimension_numbers<[1], [0], [0], [1], [0, 0, 1, 1], [], []>} : vector<16x16xf32>, vector<16x8xf32>, vector<16x8xf32> -> vector<16x8xf32>
    %5 = arith.addf %3, %4 : vector<16x8xf32>
    %c0_4 = arith.constant 0 : index
    %c0_5 = arith.constant 0 : index
    %6 = vector.load %arg2[%c0_4, %c0_5] : memref<8x32xf32, #tpu.memory_space<vmem>>, vector<8x32xf32>
    %cst_6 = arith.constant dense<0.000000e+00> : vector<16x32xf32>
    %7 = tpu.matmul %5, %6, %cst_6 {dimension_numbers = #tpu.dot_dimension_numbers<[1], [0], [0], [1], [0, 0, 1, 1], [], []>} : vector<16x8xf32>, vector<8x32xf32>, vector<16x32xf32> -> vector<16x32xf32>
    %c0_7 = arith.constant 0 : index
    %c0_8 = arith.constant 0 : index
    %8 = vector.load %arg3[%c0_7, %c0_8] : memref<1x32xf32, #tpu.memory_space<vmem>>, vector<1x32xf32>
    %9 = vector.broadcast %8 : vector<1x32xf32> to vector<16x32xf32>
    %10 = arith.addf %7, %9 : vector<16x32xf32>
    %cst_9 = arith.constant 0.000000e+00 : f32
    %11 = vector.broadcast %cst_9 : f32 to vector<16x32xf32>
    %12 = arith.maximumf %10, %11 : vector<16x32xf32>
    %c0_10 = arith.constant 0 : index
    %c0_11 = arith.constant 0 : index
    %13 = vector.load %arg4[%c0_10, %c0_11] : memref<32x32xf32, #tpu.memory_space<vmem>>, vector<32x32xf32>
    %cst_12 = arith.constant dense<0.000000e+00> : vector<16x32xf32>
    %14 = tpu.matmul %12, %13, %cst_12 {dimension_numbers = #tpu.dot_dimension_numbers<[1], [0], [0], [1], [0, 0, 1, 1], [], []>} : vector<16x32xf32>, vector<32x32xf32>, vector<16x32xf32> -> vector<16x32xf32>
    %c0_13 = arith.constant 0 : index
    %c0_14 = arith.constant 0 : index
    %15 = vector.load %arg5[%c0_13, %c0_14] : memref<1x32xf32, #tpu.memory_space<vmem>>, vector<1x32xf32>
    %16 = vector.broadcast %15 : vector<1x32xf32> to vector<16x32xf32>
    %17 = arith.addf %14, %16 : vector<16x32xf32>
    %cst_15 = arith.constant 0.000000e+00 : f32
    %18 = vector.broadcast %cst_15 : f32 to vector<16x32xf32>
    %19 = arith.maximumf %17, %18 : vector<16x32xf32>
    %cst_16 = arith.constant 1.000000e+00 : f32
    %20 = vector.broadcast %cst_16 : f32 to vector<16x32xf32>
    %21 = arith.mulf %20, %19 : vector<16x32xf32>
    %cst_17 = arith.constant dense<0.000000e+00> : vector<16x32xf32>
    %22 = tpu.matmul %1, %19, %cst_17 {dimension_numbers = #tpu.dot_dimension_numbers<[1], [0], [0], [1], [0, 0, 1, 1], [], []>} : vector<16x16xf32>, vector<16x32xf32>, vector<16x32xf32> -> vector<16x32xf32>
    %23 = arith.addf %21, %22 : vector<16x32xf32>
    %c0_18 = arith.constant 0 : index
    %c0_19 = arith.constant 0 : index
    %24 = vector.load %arg6[%c0_18, %c0_19] : memref<32x32xf32, #tpu.memory_space<vmem>>, vector<32x32xf32>
    %cst_20 = arith.constant dense<0.000000e+00> : vector<16x32xf32>
    %25 = tpu.matmul %23, %24, %cst_20 {dimension_numbers = #tpu.dot_dimension_numbers<[1], [0], [0], [1], [0, 0, 1, 1], [], []>} : vector<16x32xf32>, vector<32x32xf32>, vector<16x32xf32> -> vector<16x32xf32>
    %c0_21 = arith.constant 0 : index
    %c0_22 = arith.constant 0 : index
    %26 = vector.load %arg7[%c0_21, %c0_22] : memref<1x32xf32, #tpu.memory_space<vmem>>, vector<1x32xf32>
    %27 = vector.broadcast %26 : vector<1x32xf32> to vector<16x32xf32>
    %28 = arith.addf %25, %27 : vector<16x32xf32>
    %cst_23 = arith.constant 0.000000e+00 : f32
    %29 = vector.broadcast %cst_23 : f32 to vector<16x32xf32>
    %30 = arith.maximumf %28, %29 : vector<16x32xf32>
    %c0_24 = arith.constant 0 : index
    %c0_25 = arith.constant 0 : index
    %31 = vector.load %arg8[%c0_24, %c0_25] : memref<32x32xf32, #tpu.memory_space<vmem>>, vector<32x32xf32>
    %cst_26 = arith.constant dense<0.000000e+00> : vector<16x32xf32>
    %32 = tpu.matmul %30, %31, %cst_26 {dimension_numbers = #tpu.dot_dimension_numbers<[1], [0], [0], [1], [0, 0, 1, 1], [], []>} : vector<16x32xf32>, vector<32x32xf32>, vector<16x32xf32> -> vector<16x32xf32>
    %c0_27 = arith.constant 0 : index
    %c0_28 = arith.constant 0 : index
    %33 = vector.load %arg9[%c0_27, %c0_28] : memref<1x32xf32, #tpu.memory_space<vmem>>, vector<1x32xf32>
    %34 = vector.broadcast %33 : vector<1x32xf32> to vector<16x32xf32>
    %35 = arith.addf %32, %34 : vector<16x32xf32>
    %36 = arith.addf %19, %35 : vector<16x32xf32>
    %c0_29 = arith.constant 0 : index
    %c0_30 = arith.constant 0 : index
    %37 = vector.load %arg10[%c0_29, %c0_30] : memref<32x4xf32, #tpu.memory_space<vmem>>, vector<32x4xf32>
    %cst_31 = arith.constant dense<0.000000e+00> : vector<16x4xf32>
    %38 = tpu.matmul %36, %37, %cst_31 {dimension_numbers = #tpu.dot_dimension_numbers<[1], [0], [0], [1], [0, 0, 1, 1], [], []>} : vector<16x32xf32>, vector<32x4xf32>, vector<16x4xf32> -> vector<16x4xf32>
    %c0_32 = arith.constant 0 : index
    %c0_33 = arith.constant 0 : index
    %39 = vector.load %arg11[%c0_32, %c0_33] : memref<1x4xf32, #tpu.memory_space<vmem>>, vector<1x4xf32>
    %40 = vector.broadcast %39 : vector<1x4xf32> to vector<16x4xf32>
    %41 = arith.addf %38, %40 : vector<16x4xf32>
    %cst_34 = arith.constant dense<0xFF800000> : vector<16xf32>
    %42 = vector.multi_reduction <maximumf>, %41, %cst_34 [1] : vector<16x4xf32> to vector<16xf32>
    %43 = vector.shape_cast %42 : vector<16xf32> to vector<16x1xf32>
    %44 = vector.broadcast %43 : vector<16x1xf32> to vector<16x4xf32>
    %45 = arith.subf %41, %44 : vector<16x4xf32>
    %46 = math.exp %45 : vector<16x4xf32>
    %cst_35 = arith.constant dense<0.000000e+00> : vector<16xf32>
    %47 = vector.multi_reduction <add>, %46, %cst_35 [1] : vector<16x4xf32> to vector<16xf32>
    %48 = vector.shape_cast %47 : vector<16xf32> to vector<16x1xf32>
    %49 = math.log %48 : vector<16x1xf32>
    %50 = vector.broadcast %49 : vector<16x1xf32> to vector<16x4xf32>
    %51 = arith.subf %45, %50 : vector<16x4xf32>
    %c0_36 = arith.constant 0 : index
    %c0_37 = arith.constant 0 : index
    %52 = vector.load %arg12[%c0_36, %c0_37] : memref<16x4xf32, #tpu.memory_space<vmem>>, vector<16x4xf32>
    tpu.vector_store %arg12[%c0_36, %c0_37], %51 {strides = array<i32>} : memref<16x4xf32, #tpu.memory_space<vmem>>, vector<16x4xf32>,
    return
  }
}

</mosaic_0001>

<llo_original>
// kernel: _gin_lin_skip_pallas.1
$region0: #{_gin_lin_skip_pallas.1}
  #allocation0 [shape = 'u32[]', space=smem, size = 0x4, offset = 0x4, fixed_abs, tag = 'smem constant byte address 0x4 - core index']
  #allocation1 [shape = 'u32[144,128]{1,0:T(1,128)}', space=vmem, size = 0x12000, scoped, tag = 'internal scratch']
  %s0 = inlined_call_operand.vmem [shape: f32[16,8], index: 0, kind: input, shape index: {}]
  %s1 = inlined_call_operand.hbm [shape: f32[16,16], index: 1, kind: input, shape index: {}]
  %s2 = inlined_call_operand.hbm [shape: f32[8,32], index: 2, kind: input, shape index: {}]
  %s3 = inlined_call_operand.vmem [shape: f32[1,32], index: 3, kind: input, shape index: {}]
  %s4 = inlined_call_operand.vmem [shape: f32[32,32], index: 4, kind: input, shape index: {}]
  %s5 = inlined_call_operand.hbm [shape: f32[1,32], index: 5, kind: input, shape index: {}]
  %s6 = inlined_call_operand.vmem [shape: f32[32,32], index: 6, kind: input, shape index: {}]
  %s7 = inlined_call_operand.vmem [shape: f32[1,32], index: 7, kind: input, shape index: {}]
  %s8 = inlined_call_operand.hbm [shape: f32[32,32], index: 8, kind: input, shape index: {}]
  %s9 = inlined_call_operand.vmem [shape: f32[1,32], index: 9, kind: input, shape index: {}]
  %s10 = inlined_call_operand.vmem [shape: f32[32,4], index: 10, kind: input, shape index: {}]
  %s11 = inlined_call_operand.vmem [shape: f32[1,4], index: 11, kind: input, shape index: {}]
  %s12 = inlined_call_operand.vmem [shape: f32[16,4], index: 12, kind: output, shape index: {}]
  %s13 = sld [smem:[#allocation0]]
  $region74: #{_gin_lin_skip_pallas.1} parent=0
    _
  %s15 = ssub.s32 1, %s13
  %s16 = scalar_select 0, %s15, %s13
  $region1: #{_gin_lin_skip_pallas.1} parent=0
    #allocation2 [shape = 'u8[8192]{0}', space=vmem, size = 0x2000, scoped, tag = 'input window, operand 1, single buffered']
    #allocation3 [shape = 's32[1]{0}', space=sflag, size = 0x4, scoped, tag = 'scoped memory for _gin_lin_skip_pallas.1']
    #allocation4 [shape = 'u8[4096]{0}', space=vmem, size = 0x1000, scoped, tag = 'input window, operand 2, single buffered']
    #allocation5 [shape = 's32[1]{0}', space=sflag, size = 0x4, scoped, tag = 'scoped memory for _gin_lin_skip_pallas.1']
    #allocation6 [shape = 'u8[512]{0}', space=vmem, size = 0x400, scoped, tag = 'input window, operand 5, single buffered']
    #allocation7 [shape = 'u8[16384]{0}', space=vmem, size = 0x4000, scoped, tag = 'input window, operand 8, single buffered']
    #allocation8 [shape = 's32[1]{0}', space=sflag, size = 0x4, scoped, tag = 'scoped memory for _gin_lin_skip_pallas.1']
    %17 = vsyncpa [#allocation3], 0
    %18 = vsyncpa [#allocation5], 0
    %19 = vsyncpa [#allocation8], 0
    // Predicated region
    $region2: #{_gin_lin_skip_pallas.1} parent=1 // pred_check
      _
    $region3: #{_gin_lin_skip_pallas.1} parent=1 // pred_check_branch
      %21 = sbr.rel (0) target = $region5
    $region4: #{_gin_lin_skip_pallas.1} parent=1 // pred_region
      _
    $region5: #{_gin_lin_skip_pallas.1} parent=1 // pred_fallthru
      _
    // Predicated region
    $region6: #{_gin_lin_skip_pallas.1} parent=1 // pred_check
      _
    $region7: #{_gin_lin_skip_pallas.1} parent=1 // pred_check_branch
      %23 = sbr.rel (0) target = $region9
    $region8: #{_gin_lin_skip_pallas.1} parent=1 // pred_region
      %s25 = ssub.s32 256, 256
      %26 = vsyncadd [#allocation3], %s25
      %s27 = sshll.u32 [#allocation2], 4
      %s28 = int_to_ptr.vmem [resolvable:$true] %s27
      %33 = dma.hbm_to_vmem [thread:$0]  %s1, 256, %s28, [#allocation3], 128, 128, 8
    $region9: #{_gin_lin_skip_pallas.1} parent=1 // pred_fallthru
      _
    // Predicated region
    $region10: #{_gin_lin_skip_pallas.1} parent=1 // pred_check
      _
    $region11: #{_gin_lin_skip_pallas.1} parent=1 // pred_check_branch
      %35 = sbr.rel (0) target = $region13
    $region12: #{_gin_lin_skip_pallas.1} parent=1 // pred_region
      %s37 = ssub.s32 128, 128
      %38 = vsyncadd [#allocation5], %s37
      %s40 = sshll.u32 [#allocation4], 4
      %s41 = int_to_ptr.vmem [resolvable:$true] %s40
      %43 = dma.hbm_to_vmem [thread:$0]  %s2, 128, %s41, [#allocation5]
    $region13: #{_gin_lin_skip_pallas.1} parent=1 // pred_fallthru
      _
    // Predicated region
    $region14: #{_gin_lin_skip_pallas.1} parent=1 // pred_check
      _
    $region15: #{_gin_lin_skip_pallas.1} parent=1 // pred_check_branch
      %45 = sbr.rel (0) target = $region17
    $region16: #{_gin_lin_skip_pallas.1} parent=1 // pred_region
      _
    $region17: #{_gin_lin_skip_pallas.1} parent=1 // pred_fallthru
      _
    // Predicated region
    $region18: #{_gin_lin_skip_pallas.1} parent=1 // pred_check
      _
    $region19: #{_gin_lin_skip_pallas.1} parent=1 // pred_check_branch
      %47 = sbr.rel (0) target = $region21
    $region20: #{_gin_lin_skip_pallas.1} parent=1 // pred_region
      _
    $region21: #{_gin_lin_skip_pallas.1} parent=1 // pred_fallthru
      _
    // Predicated region
    $region22: #{_gin_lin_skip_pallas.1} parent=1 // pred_check
      _
    $region23: #{_gin_lin_skip_pallas.1} parent=1 // pred_check_branch
      %49 = sbr.rel (0) target = $region25
    $region24: #{_gin_lin_skip_pallas.1} parent=1 // pred_region
      %s51 = ssub.s32 16, 16
      %52 = vsyncadd [#allocation5], %s51
      %s54 = sshll.u32 [#allocation6], 4
      %s55 = int_to_ptr.vmem [resolvable:$true] %s54
      %57 = dma.hbm_to_vmem [thread:$0]  %s5, 16, %s55, [#allocation5]
    $region25: #{_gin_lin_skip_pallas.1} parent=1 // pred_fallthru
      _
    // Predicated region
    $region26: #{_gin_lin_skip_pallas.1} parent=1 // pred_check
      _
    $region27: #{_gin_lin_skip_pallas.1} parent=1 // pred_check_branch
      %59 = sbr.rel (0) target = $region29
    $region28: #{_gin_lin_skip_pallas.1} parent=1 // pred_region
      _
    $region29: #{_gin_lin_skip_pallas.1} parent=1 // pred_fallthru
      _
    // Predicated region
    $region30: #{_gin_lin_skip_pallas.1} parent=1 // pred_check
      _
    $region31: #{_gin_lin_skip_pallas.1} parent=1 // pred_check_branch
      %61 = sbr.rel (0) target = $region33
    $region32: #{_gin_lin_skip_pallas.1} parent=1 // pred_region
      _
    $region33: #{_gin_lin_skip_pallas.1} parent=1 // pred_fallthru
      _
    // Predicated region
    $region34: #{_gin_lin_skip_pallas.1} parent=1 // pred_check
      _
    $region35: #{_gin_lin_skip_pallas.1} parent=1 // pred_check_branch
      %63 = sbr.rel (0) target = $region37
    $region36: #{_gin_lin_skip_pallas.1} parent=1 // pred_region
      %s65 = ssub.s32 512, 512
      %66 = vsyncadd [#allocation8], %s65
      %s67 = sshll.u32 [#allocation7], 4
      %s68 = int_to_ptr.vmem [resolvable:$true] %s67
      %73 = dma.hbm_to_vmem [thread:$0]  %s8, 512, %s68, [#allocation8], 128, 128, 8
    $region37: #{_gin_lin_skip_pallas.1} parent=1 // pred_fallthru
      _
    // Predicated region
    $region38: #{_gin_lin_skip_pallas.1} parent=1 // pred_check
      _
    $region39: #{_gin_lin_skip_pallas.1} parent=1 // pred_check_branch
      %75 = sbr.rel (0) target = $region41
    $region40: #{_gin_lin_skip_pallas.1} parent=1 // pred_region
      _
    $region41: #{_gin_lin_skip_pallas.1} parent=1 // pred_fallthru
      _
    // Predicated region
    $region42: #{_gin_lin_skip_pallas.1} parent=1 // pred_check
      _
    $region43: #{_gin_lin_skip_pallas.1} parent=1 // pred_check_branch
      %77 = sbr.rel (0) target = $region45
    $region44: #{_gin_lin_skip_pallas.1} parent=1 // pred_region
      _
    $region45: #{_gin_lin_skip_pallas.1} parent=1 // pred_fallthru
      _
    // Predicated region
    $region46: #{_gin_lin_skip_pallas.1} parent=1 // pred_check
      _
    $region47: #{_gin_lin_skip_pallas.1} parent=1 // pred_check_branch
      %79 = sbr.rel (0) target = $region49
    $region48: #{_gin_lin_skip_pallas.1} parent=1 // pred_region
      _
    $region49: #{_gin_lin_skip_pallas.1} parent=1 // pred_fallthru
      _
    // Predicated region
    $region50: #{_gin_lin_skip_pallas.1} parent=1 // pred_check
      _
    $region51: #{_gin_lin_skip_pallas.1} parent=1 // pred_check_branch
      %81 = sbr.rel (0) target = $region53
    $region52: #{_gin_lin_skip_pallas.1} parent=1 // pred_region
      %82 = dma.done [#allocation3], 256
    $region53: #{_gin_lin_skip_pallas.1} parent=1 // pred_fallthru
      _
    // Predicated region
    $region54: #{_gin_lin_skip_pallas.1} parent=1 // pred_check
      _
    $region55: #{_gin_lin_skip_pallas.1} parent=1 // pred_check_branch
      %84 = sbr.rel (0) target = $region57
    $region56: #{_gin_lin_skip_pallas.1} parent=1 // pred_region
      %85 = dma.done [#allocation5], 128
    $region57: #{_gin_lin_skip_pallas.1} parent=1 // pred_fallthru
      _
    // Predicated region
    $region58: #{_gin_lin_skip_pallas.1} parent=1 // pred_check
      _
    $region59: #{_gin_lin_skip_pallas.1} parent=1 // pred_check_branch
      %87 = sbr.rel (0) target = $region61
    $region60: #{_gin_lin_skip_pallas.1} parent=1 // pred_region
      %88 = dma.done [#allocation5], 16
    $region61: #{_gin_lin_skip_pallas.1} parent=1 // pred_fallthru
      _
    // Predicated region
    $region62: #{_gin_lin_skip_pallas.1} parent=1 // pred_check
      _
    $region63: #{_gin_lin_skip_pallas.1} parent=1 // pred_check_branch
      %90 = sbr.rel (0) target = $region65
    $region64: #{_gin_lin_skip_pallas.1} parent=1 // pred_region
      %91 = dma.done [#allocation8], 512
    $region65: #{_gin_lin_skip_pallas.1} parent=1 // pred_fallthru
      _
    %v92 = vld [vmem:[%s0] sm:$0xff]
    %v93 = vld [vmem:[%s0 + $0x8] sm:$0xff]
    %v94 = vld [vmem:[#allocation2] sm:$0xff]
    %v95 = vld [vmem:[#allocation2 + $0x8] sm:$0xff]
    %vm96 = vcmask 130048
    %v98 = vsel %vm96, %v94, 0
    %v101 = vsel %vm96, %v95, 0
    %103 = vmatprep.subr.mxu0 0.0
    %104 = vmatpush1.msra.mxu0 0.0
    %105 = vmatprep.subr.mxu0 0.0
    %106 = vmatpush1.msra.mxu0 0.0
    %107 = vmatprep.subr.mxu0 0.0
    %108 = vmatpush1.msra.mxu0 0.0
    %109 = vmatprep.subr.mxu0 0.0
    %110 = vmatpush1.msra.mxu0 0.0
    %111 = vmatprep.subr.mxu0 0.0
    %112 = vmatpush1.msra.mxu0 0.0
    %113 = vmatprep.subr.mxu0 0.0
    %114 = vmatpush1.msra.mxu0 0.0
    %115 = vmatprep.subr.mxu0 0.0
    %116 = vmatpush1.msra.mxu0 0.0
    %117 = vmatprep.subr.mxu0 0.0
    %118 = vmatpush1.msra.mxu0 0.0
    %119 = vmatprep.subr.mxu0 0.0
    %120 = vmatpush1.msra.mxu0 0.0
    %121 = vmatprep.subr.mxu0 0.0
    %122 = vmatpush1.msra.mxu0 0.0
    %123 = vmatprep.subr.mxu0 0.0
    %124 = vmatpush1.msra.mxu0 0.0
    %125 = vmatprep.subr.mxu0 0.0
    %126 = vmatpush1.msra.mxu0 0.0
    %127 = vmatprep.subr.mxu0 0.0
    %128 = vmatpush1.msra.mxu0 0.0
    %129 = vmatprep.subr.mxu0 0.0
    %130 = vmatpush1.msra.mxu0 0.0
    %131 = vmatprep.subr.mxu0 0.0
    %132 = vmatpush1.msra.mxu0 %v93
    %133 = vmatprep.subr.mxu0 0.0
    %134 = vmatpush1.msra.mxu0 %v92
    %135 = vmatprep.subr.mxu0 0.0
    %136 = vmatpush2.msra.mxu0 0.0
    %137 = vmatprep.subr.mxu0 0.0
    %138 = vmatpush2.msra.mxu0 0.0
    %139 = vmatprep.subr.mxu0 0.0
    %140 = vmatpush2.msra.mxu0 0.0
    %141 = vmatprep.subr.mxu0 0.0
    %142 = vmatpush2.msra.mxu0 0.0
    %143 = vmatprep.subr.mxu0 0.0
    %144 = vmatpush2.msra.mxu0 0.0
    %145 = vmatprep.subr.mxu0 0.0
    %146 = vmatpush2.msra.mxu0 0.0
    %147 = vmatprep.subr.mxu0 0.0
    %148 = vmatpush2.msra.mxu0 0.0
    %149 = vmatprep.subr.mxu0 0.0
    %150 = vmatpush2.msra.mxu0 0.0
    %151 = vmatprep.subr.mxu0 0.0
    %152 = vmatpush2.msra.mxu0 0.0
    %153 = vmatprep.subr.mxu0 0.0
    %154 = vmatpush2.msra.mxu0 0.0
    %155 = vmatprep.subr.mxu0 0.0
    %156 = vmatpush2.msra.mxu0 0.0
    %157 = vmatprep.subr.mxu0 0.0
    %158 = vmatpush2.msra.mxu0 0.0
    %159 = vmatprep.subr.mxu0 0.0
    %160 = vmatpush2.msra.mxu0 0.0
    %161 = vmatprep.subr.mxu0 0.0
    %162 = vmatpush2.msra.mxu0 0.0
    %163 = vmatprep.subr.mxu0 0.0
    %164 = vmatpush2.msra.mxu0 0.0
    %165 = vmatprep.subr.mxu0 0.0
    %166 = vmatpush2.msra.mxu0 0.0
    %167 = vmatprep.mubr.f32.mxu0 0.0
    %168 = vmatmul.mubr.f32.gmra.mxu0 %v98
    %v169 = vpop.f32.mrf.mxu0
    %v170 = vadd.f32 0.0, %v169
    %v171 = vpop.f32.mrf.mxu0
    %172 = vmatprep.mubr.f32.mxu0 0.0
    %173 = vmatmul.mubr.f32.gmra.mxu0 %v101
    %v174 = vpop.f32.mrf.mxu0
    %v175 = vadd.f32 0.0, %v174
    %v176 = vpop.f32.mrf.mxu0
    %177 = vdwg.mxu0
    %v178 = vadd.f32 %v92, %v170
    %v179 = vadd.f32 %v93, %v175
    %v180 = vld [vmem:[#allocation4] sm:$0xff]
    %v181 = vld [vmem:[%s3] sm:$0x1]
    %v183 = vlaneseq
    %v184 = vshrl.u32 %v183, 7
    %v185 = vsub.s32 0, %v184
    %v186 = vrot.slane %v181, %v185
    %vm188 = vcmask 64512
    %v190 = vsel %vm188, %v178, 0
    %v193 = vsel %vm188, %v179, 0
    %195 = vmatprep.subr.mxu0 0.0
    %196 = vmatpush1.msra.mxu0 0.0
    %197 = vmatprep.subr.mxu0 0.0
    %198 = vmatpush1.msra.mxu0 0.0
    %199 = vmatprep.subr.mxu0 0.0
    %200 = vmatpush1.msra.mxu0 0.0
    %201 = vmatprep.subr.mxu0 0.0
    %202 = vmatpush1.msra.mxu0 0.0
    %203 = vmatprep.subr.mxu0 0.0
    %204 = vmatpush1.msra.mxu0 0.0
    %205 = vmatprep.subr.mxu0 0.0
    %206 = vmatpush1.msra.mxu0 0.0
    %207 = vmatprep.subr.mxu0 0.0
    %208 = vmatpush1.msra.mxu0 0.0
    %209 = vmatprep.subr.mxu0 0.0
    %210 = vmatpush1.msra.mxu0 0.0
    %211 = vmatprep.subr.mxu0 0.0
    %212 = vmatpush1.msra.mxu0 0.0
    %213 = vmatprep.subr.mxu0 0.0
    %214 = vmatpush1.msra.mxu0 0.0
    %215 = vmatprep.subr.mxu0 0.0
    %216 = vmatpush1.msra.mxu0 0.0
    %217 = vmatprep.subr.mxu0 0.0
    %218 = vmatpush1.msra.mxu0 0.0
    %219 = vmatprep.subr.mxu0 0.0
    %220 = vmatpush1.msra.mxu0 0.0
    %221 = vmatprep.subr.mxu0 0.0
    %222 = vmatpush1.msra.mxu0 0.0
    %223 = vmatprep.subr.mxu0 0.0
    %224 = vmatpush1.msra.mxu0 0.0
    %225 = vmatprep.subr.mxu0 0.0
    %226 = vmatpush1.msra.mxu0 %v180
    %227 = vmatprep.subr.mxu0 0.0
    %228 = vmatpush2.msra.mxu0 0.0
    %229 = vmatprep.subr.mxu0 0.0
    %230 = vmatpush2.msra.mxu0 0.0
    %231 = vmatprep.subr.mxu0 0.0
    %232 = vmatpush2.msra.mxu0 0.0
    %233 = vmatprep.subr.mxu0 0.0
    %234 = vmatpush2.msra.mxu0 0.0
    %235 = vmatprep.subr.mxu0 0.0
    %236 = vmatpush2.msra.mxu0 0.0
    %237 = vmatprep.subr.mxu0 0.0
    %238 = vmatpush2.msra.mxu0 0.0
    %239 = vmatprep.subr.mxu0 0.0
    %240 = vmatpush2.msra.mxu0 0.0
    %241 = vmatprep.subr.mxu0 0.0
    %242 = vmatpush2.msra.mxu0 0.0
    %243 = vmatprep.subr.mxu0 0.0
    %244 = vmatpush2.msra.mxu0 0.0
    %245 = vmatprep.subr.mxu0 0.0
    %246 = vmatpush2.msra.mxu0 0.0
    %247 = vmatprep.subr.mxu0 0.0
    %248 = vmatpush2.msra.mxu0 0.0
    %249 = vmatprep.subr.mxu0 0.0
    %250 = vmatpush2.msra.mxu0 0.0
    %251 = vmatprep.subr.mxu0 0.0
    %252 = vmatpush2.msra.mxu0 0.0
    %253 = vmatprep.subr.mxu0 0.0
    %254 = vmatpush2.msra.mxu0 0.0
    %255 = vmatprep.subr.mxu0 0.0
    %256 = vmatpush2.msra.mxu0 0.0
    %257 = vmatprep.subr.mxu0 0.0
    %258 = vmatpush2.msra.mxu0 0.0
    %259 = vmatprep.mubr.f32.mxu0 0.0
    %260 = vmatmul.mubr.f32.gmra.mxu0 %v190
    %v261 = vpop.f32.mrf.mxu0
    %v262 = vadd.f32 %v186, %v261
    %v263 = vpop.f32.mrf.mxu0
    %264 = vmatprep.mubr.f32.mxu0 0.0
    %265 = vmatmul.mubr.f32.gmra.mxu0 %v193
    %v266 = vpop.f32.mrf.mxu0
    %v267 = vadd.f32 %v186, %v266
    %v268 = vpop.f32.mrf.mxu0
    %269 = vdwg.mxu0
    %v270 = vmax.f32 %v262, 0.0
    %v271 = vmax.f32 %v267, 0.0
    %v272 = vld [vmem:[%s4] sm:$0xff]
    %v273 = vld [vmem:[%s4 + $0x8] sm:$0xff]
    %v274 = vld [vmem:[%s4 + $0x10] sm:$0xff]
    %v275 = vld [vmem:[%s4 + $0x18] sm:$0xff]
    %v276 = vld [vmem:[#allocation6] sm:$0x1]
    %v278 = vlaneseq
    %v279 = vshrl.u32 %v278, 7
    %v280 = vsub.s32 0, %v279
    %v281 = vrot.slane %v276, %v280
    %vm283 = vcmask 261120
    %v285 = vsel %vm283, %v270, 0
    %v288 = vsel %vm283, %v271, 0
    %290 = vmatprep.subr.mxu0 0.0
    %291 = vmatpush1.msra.mxu0 0.0
    %292 = vmatprep.subr.mxu0 0.0
    %293 = vmatpush1.msra.mxu0 0.0
    %294 = vmatprep.subr.mxu0 0.0
    %295 = vmatpush1.msra.mxu0 0.0
    %296 = vmatprep.subr.mxu0 0.0
    %297 = vmatpush1.msra.mxu0 0.0
    %298 = vmatprep.subr.mxu0 0.0
    %299 = vmatpush1.msra.mxu0 0.0
    %300 = vmatprep.subr.mxu0 0.0
    %301 = vmatpush1.msra.mxu0 0.0
    %302 = vmatprep.subr.mxu0 0.0
    %303 = vmatpush1.msra.mxu0 0.0
    %304 = vmatprep.subr.mxu0 0.0
    %305 = vmatpush1.msra.mxu0 0.0
    %306 = vmatprep.subr.mxu0 0.0
    %307 = vmatpush1.msra.mxu0 0.0
    %308 = vmatprep.subr.mxu0 0.0
    %309 = vmatpush1.msra.mxu0 0.0
    %310 = vmatprep.subr.mxu0 0.0
    %311 = vmatpush1.msra.mxu0 0.0
    %312 = vmatprep.subr.mxu0 0.0
    %313 = vmatpush1.msra.mxu0 0.0
    %314 = vmatprep.subr.mxu0 0.0
    %315 = vmatpush1.msra.mxu0 %v275
    %316 = vmatprep.subr.mxu0 0.0
    %317 = vmatpush1.msra.mxu0 %v274
    %318 = vmatprep.subr.mxu0 0.0
    %319 = vmatpush1.msra.mxu0 %v273
    %320 = vmatprep.subr.mxu0 0.0
    %321 = vmatpush1.msra.mxu0 %v272
    %322 = vmatprep.subr.mxu0 0.0
    %323 = vmatpush2.msra.mxu0 0.0
    %324 = vmatprep.subr.mxu0 0.0
    %325 = vmatpush2.msra.mxu0 0.0
    %326 = vmatprep.subr.mxu0 0.0
    %327 = vmatpush2.msra.mxu0 0.0
    %328 = vmatprep.subr.mxu0 0.0
    %329 = vmatpush2.msra.mxu0 0.0
    %330 = vmatprep.subr.mxu0 0.0
    %331 = vmatpush2.msra.mxu0 0.0
    %332 = vmatprep.subr.mxu0 0.0
    %333 = vmatpush2.msra.mxu0 0.0
    %334 = vmatprep.subr.mxu0 0.0
    %335 = vmatpush2.msra.mxu0 0.0
    %336 = vmatprep.subr.mxu0 0.0
    %337 = vmatpush2.msra.mxu0 0.0
    %338 = vmatprep.subr.mxu0 0.0
    %339 = vmatpush2.msra.mxu0 0.0
    %340 = vmatprep.subr.mxu0 0.0
    %341 = vmatpush2.msra.mxu0 0.0
    %342 = vmatprep.subr.mxu0 0.0
    %343 = vmatpush2.msra.mxu0 0.0
    %344 = vmatprep.subr.mxu0 0.0
    %345 = vmatpush2.msra.mxu0 0.0
    %346 = vmatprep.subr.mxu0 0.0
    %347 = vmatpush2.msra.mxu0 0.0
    %348 = vmatprep.subr.mxu0 0.0
    %349 = vmatpush2.msra.mxu0 0.0
    %350 = vmatprep.subr.mxu0 0.0
    %351 = vmatpush2.msra.mxu0 0.0
    %352 = vmatprep.subr.mxu0 0.0
    %353 = vmatpush2.msra.mxu0 0.0
    %354 = vmatprep.mubr.f32.mxu0 0.0
    %355 = vmatmul.mubr.f32.gmra.mxu0 %v285
    %v356 = vpop.f32.mrf.mxu0
    %v357 = vadd.f32 %v281, %v356
    %v358 = vpop.f32.mrf.mxu0
    %359 = vmatprep.mubr.f32.mxu0 0.0
    %360 = vmatmul.mubr.f32.gmra.mxu0 %v288
    %v361 = vpop.f32.mrf.mxu0
    %v362 = vadd.f32 %v281, %v361
    %v363 = vpop.f32.mrf.mxu0
    %364 = vdwg.mxu0
    %v365 = vmax.f32 %v357, 0.0
    %v366 = vmax.f32 %v362, 0.0
    %367 = vmatprep.subr.mxu0 0.0
    %368 = vmatpush1.msra.mxu0 0.0
    %369 = vmatprep.subr.mxu0 0.0
    %370 = vmatpush1.msra.mxu0 0.0
    %371 = vmatprep.subr.mxu0 0.0
    %372 = vmatpush1.msra.mxu0 0.0
    %373 = vmatprep.subr.mxu0 0.0
    %374 = vmatpush1.msra.mxu0 0.0
    %375 = vmatprep.subr.mxu0 0.0
    %376 = vmatpush1.msra.mxu0 0.0
    %377 = vmatprep.subr.mxu0 0.0
    %378 = vmatpush1.msra.mxu0 0.0
    %379 = vmatprep.subr.mxu0 0.0
    %380 = vmatpush1.msra.mxu0 0.0
    %381 = vmatprep.subr.mxu0 0.0
    %382 = vmatpush1.msra.mxu0 0.0
    %383 = vmatprep.subr.mxu0 0.0
    %384 = vmatpush1.msra.mxu0 0.0
    %385 = vmatprep.subr.mxu0 0.0
    %386 = vmatpush1.msra.mxu0 0.0
    %387 = vmatprep.subr.mxu0 0.0
    %388 = vmatpush1.msra.mxu0 0.0
    %389 = vmatprep.subr.mxu0 0.0
    %390 = vmatpush1.msra.mxu0 0.0
    %391 = vmatprep.subr.mxu0 0.0
    %392 = vmatpush1.msra.mxu0 0.0
    %393 = vmatprep.subr.mxu0 0.0
    %394 = vmatpush1.msra.mxu0 0.0
    %395 = vmatprep.subr.mxu0 0.0
    %396 = vmatpush1.msra.mxu0 %v366
    %397 = vmatprep.subr.mxu0 0.0
    %398 = vmatpush1.msra.mxu0 %v365
    %399 = vmatprep.subr.mxu0 0.0
    %400 = vmatpush2.msra.mxu0 0.0
    %401 = vmatprep.subr.mxu0 0.0
    %402 = vmatpush2.msra.mxu0 0.0
    %403 = vmatprep.subr.mxu0 0.0
    %404 = vmatpush2.msra.mxu0 0.0
    %405 = vmatprep.subr.mxu0 0.0
    %406 = vmatpush2.msra.mxu0 0.0
    %407 = vmatprep.subr.mxu0 0.0
    %408 = vmatpush2.msra.mxu0 0.0
    %409 = vmatprep.subr.mxu0 0.0
    %410 = vmatpush2.msra.mxu0 0.0
    %411 = vmatprep.subr.mxu0 0.0
    %412 = vmatpush2.msra.mxu0 0.0
    %413 = vmatprep.subr.mxu0 0.0
    %414 = vmatpush2.msra.mxu0 0.0
    %415 = vmatprep.subr.mxu0 0.0
    %416 = vmatpush2.msra.mxu0 0.0
    %417 = vmatprep.subr.mxu0 0.0
    %418 = vmatpush2.msra.mxu0 0.0
    %419 = vmatprep.subr.mxu0 0.0
    %420 = vmatpush2.msra.mxu0 0.0
    %421 = vmatprep.subr.mxu0 0.0
    %422 = vmatpush2.msra.mxu0 0.0
    %423 = vmatprep.subr.mxu0 0.0
    %424 = vmatpush2.msra.mxu0 0.0
    %425 = vmatprep.subr.mxu0 0.0
    %426 = vmatpush2.msra.mxu0 0.0
    %427 = vmatprep.subr.mxu0 0.0
    %428 = vmatpush2.msra.mxu0 0.0
    %429 = vmatprep.subr.mxu0 0.0
    %430 = vmatpush2.msra.mxu0 0.0
    %431 = vmatprep.mubr.f32.mxu0 0.0
    %432 = vmatmul.mubr.f32.gmra.mxu0 %v98
    %v433 = vpop.f32.mrf.mxu0
    %v434 = vadd.f32 0.0, %v433
    %v435 = vpop.f32.mrf.mxu0
    %436 = vmatprep.mubr.f32.mxu0 0.0
    %437 = vmatmul.mubr.f32.gmra.mxu0 %v101
    %v438 = vpop.f32.mrf.mxu0
    %v439 = vadd.f32 0.0, %v438
    %v440 = vpop.f32.mrf.mxu0
    %441 = vdwg.mxu0
    %v442 = vadd.f32 %v365, %v434
    %v443 = vadd.f32 %v366, %v439
    %v444 = vld [vmem:[%s6] sm:$0xff]
    %v445 = vld [vmem:[%s6 + $0x8] sm:$0xff]
    %v446 = vld [vmem:[%s6 + $0x10] sm:$0xff]
    %v447 = vld [vmem:[%s6 + $0x18] sm:$0xff]
    %v448 = vld [vmem:[%s7] sm:$0x1]
    %v450 = vlaneseq
    %v451 = vshrl.u32 %v450, 7
    %v452 = vsub.s32 0, %v451
    %v453 = vrot.slane %v448, %v452
    %v456 = vsel %vm283, %v442, 0
    %v459 = vsel %vm283, %v443, 0
    %461 = vmatprep.subr.mxu0 0.0
    %462 = vmatpush1.msra.mxu0 0.0
    %463 = vmatprep.subr.mxu0 0.0
    %464 = vmatpush1.msra.mxu0 0.0
    %465 = vmatprep.subr.mxu0 0.0
    %466 = vmatpush1.msra.mxu0 0.0
    %467 = vmatprep.subr.mxu0 0.0
    %468 = vmatpush1.msra.mxu0 0.0
    %469 = vmatprep.subr.mxu0 0.0
    %470 = vmatpush1.msra.mxu0 0.0
    %471 = vmatprep.subr.mxu0 0.0
    %472 = vmatpush1.msra.mxu0 0.0
    %473 = vmatprep.subr.mxu0 0.0
    %474 = vmatpush1.msra.mxu0 0.0
    %475 = vmatprep.subr.mxu0 0.0
    %476 = vmatpush1.msra.mxu0 0.0
    %477 = vmatprep.subr.mxu0 0.0
    %478 = vmatpush1.msra.mxu0 0.0
    %479 = vmatprep.subr.mxu0 0.0
    %480 = vmatpush1.msra.mxu0 0.0
    %481 = vmatprep.subr.mxu0 0.0
    %482 = vmatpush1.msra.mxu0 0.0
    %483 = vmatprep.subr.mxu0 0.0
    %484 = vmatpush1.msra.mxu0 0.0
    %485 = vmatprep.subr.mxu0 0.0
    %486 = vmatpush1.msra.mxu0 %v447
    %487 = vmatprep.subr.mxu0 0.0
    %488 = vmatpush1.msra.mxu0 %v446
    %489 = vmatprep.subr.mxu0 0.0
    %490 = vmatpush1.msra.mxu0 %v445
    %491 = vmatprep.subr.mxu0 0.0
    %492 = vmatpush1.msra.mxu0 %v444
    %493 = vmatprep.subr.mxu0 0.0
    %494 = vmatpush2.msra.mxu0 0.0
    %495 = vmatprep.subr.mxu0 0.0
    %496 = vmatpush2.msra.mxu0 0.0
    %497 = vmatprep.subr.mxu0 0.0
    %498 = vmatpush2.msra.mxu0 0.0
    %499 = vmatprep.subr.mxu0 0.0
    %500 = vmatpush2.msra.mxu0 0.0
    %501 = vmatprep.subr.mxu0 0.0
    %502 = vmatpush2.msra.mxu0 0.0
    %503 = vmatprep.subr.mxu0 0.0
    %504 = vmatpush2.msra.mxu0 0.0
    %505 = vmatprep.subr.mxu0 0.0
    %506 = vmatpush2.msra.mxu0 0.0
    %507 = vmatprep.subr.mxu0 0.0
    %508 = vmatpush2.msra.mxu0 0.0
    %509 = vmatprep.subr.mxu0 0.0
    %510 = vmatpush2.msra.mxu0 0.0
    %511 = vmatprep.subr.mxu0 0.0
    %512 = vmatpush2.msra.mxu0 0.0
    %513 = vmatprep.subr.mxu0 0.0
    %514 = vmatpush2.msra.mxu0 0.0
    %515 = vmatprep.subr.mxu0 0.0
    %516 = vmatpush2.msra.mxu0 0.0
    %517 = vmatprep.subr.mxu0 0.0
    %518 = vmatpush2.msra.mxu0 0.0
    %519 = vmatprep.subr.mxu0 0.0
    %520 = vmatpush2.msra.mxu0 0.0
    %521 = vmatprep.subr.mxu0 0.0
    %522 = vmatpush2.msra.mxu0 0.0
    %523 = vmatprep.subr.mxu0 0.0
    %524 = vmatpush2.msra.mxu0 0.0
    %525 = vmatprep.mubr.f32.mxu0 0.0
    %526 = vmatmul.mubr.f32.gmra.mxu0 %v456
    %v527 = vpop.f32.mrf.mxu0
    %v528 = vadd.f32 %v453, %v527
    %v529 = vpop.f32.mrf.mxu0
    %530 = vmatprep.mubr.f32.mxu0 0.0
    %531 = vmatmul.mubr.f32.gmra.mxu0 %v459
    %v532 = vpop.f32.mrf.mxu0
    %v533 = vadd.f32 %v453, %v532
    %v534 = vpop.f32.mrf.mxu0
    %535 = vdwg.mxu0
    %v536 = vmax.f32 %v528, 0.0
    %v537 = vmax.f32 %v533, 0.0
    %v538 = vld [vmem:[#allocation7] sm:$0xff]
    %v539 = vld [vmem:[#allocation7 + $0x8] sm:$0xff]
    %v540 = vld [vmem:[#allocation7 + $0x10] sm:$0xff]
    %v541 = vld [vmem:[#allocation7 + $0x18] sm:$0xff]
    %v542 = vld [vmem:[%s9] sm:$0x1]
    %v544 = vlaneseq
    %v545 = vshrl.u32 %v544, 7
    %v546 = vsub.s32 0, %v545
    %v547 = vrot.slane %v542, %v546
    %v550 = vsel %vm283, %v536, 0
    %v553 = vsel %vm283, %v537, 0
    %555 = vmatprep.subr.mxu0 0.0
    %556 = vmatpush1.msra.mxu0 0.0
    %557 = vmatprep.subr.mxu0 0.0
    %558 = vmatpush1.msra.mxu0 0.0
    %559 = vmatprep.subr.mxu0 0.0
    %560 = vmatpush1.msra.mxu0 0.0
    %561 = vmatprep.subr.mxu0 0.0
    %562 = vmatpush1.msra.mxu0 0.0
    %563 = vmatprep.subr.mxu0 0.0
    %564 = vmatpush1.msra.mxu0 0.0
    %565 = vmatprep.subr.mxu0 0.0
    %566 = vmatpush1.msra.mxu0 0.0
    %567 = vmatprep.subr.mxu0 0.0
    %568 = vmatpush1.msra.mxu0 0.0
    %569 = vmatprep.subr.mxu0 0.0
    %570 = vmatpush1.msra.mxu0 0.0
    %571 = vmatprep.subr.mxu0 0.0
    %572 = vmatpush1.msra.mxu0 0.0
    %573 = vmatprep.subr.mxu0 0.0
    %574 = vmatpush1.msra.mxu0 0.0
    %575 = vmatprep.subr.mxu0 0.0
    %576 = vmatpush1.msra.mxu0 0.0
    %577 = vmatprep.subr.mxu0 0.0
    %578 = vmatpush1.msra.mxu0 0.0
    %579 = vmatprep.subr.mxu0 0.0
    %580 = vmatpush1.msra.mxu0 %v541
    %581 = vmatprep.subr.mxu0 0.0
    %582 = vmatpush1.msra.mxu0 %v540
    %583 = vmatprep.subr.mxu0 0.0
    %584 = vmatpush1.msra.mxu0 %v539
    %585 = vmatprep.subr.mxu0 0.0
    %586 = vmatpush1.msra.mxu0 %v538
    %587 = vmatprep.subr.mxu0 0.0
    %588 = vmatpush2.msra.mxu0 0.0
    %589 = vmatprep.subr.mxu0 0.0
    %590 = vmatpush2.msra.mxu0 0.0
    %591 = vmatprep.subr.mxu0 0.0
    %592 = vmatpush2.msra.mxu0 0.0
    %593 = vmatprep.subr.mxu0 0.0
    %594 = vmatpush2.msra.mxu0 0.0
    %595 = vmatprep.subr.mxu0 0.0
    %596 = vmatpush2.msra.mxu0 0.0
    %597 = vmatprep.subr.mxu0 0.0
    %598 = vmatpush2.msra.mxu0 0.0
    %599 = vmatprep.subr.mxu0 0.0
    %600 = vmatpush2.msra.mxu0 0.0
    %601 = vmatprep.subr.mxu0 0.0
    %602 = vmatpush2.msra.mxu0 0.0
    %603 = vmatprep.subr.mxu0 0.0
    %604 = vmatpush2.msra.mxu0 0.0
    %605 = vmatprep.subr.mxu0 0.0
    %606 = vmatpush2.msra.mxu0 0.0
    %607 = vmatprep.subr.mxu0 0.0
    %608 = vmatpush2.msra.mxu0 0.0
    %609 = vmatprep.subr.mxu0 0.0
    %610 = vmatpush2.msra.mxu0 0.0
    %611 = vmatprep.subr.mxu0 0.0
    %612 = vmatpush2.msra.mxu0 0.0
    %613 = vmatprep.subr.mxu0 0.0
    %614 = vmatpush2.msra.mxu0 0.0
    %615 = vmatprep.subr.mxu0 0.0
    %616 = vmatpush2.msra.mxu0 0.0
    %617 = vmatprep.subr.mxu0 0.0
    %618 = vmatpush2.msra.mxu0 0.0
    %619 = vmatprep.mubr.f32.mxu0 0.0
    %620 = vmatmul.mubr.f32.gmra.mxu0 %v550
    %v621 = vpop.f32.mrf.mxu0
    %v622 = vadd.f32 %v547, %v621
    %v623 = vpop.f32.mrf.mxu0
    %624 = vmatprep.mubr.f32.mxu0 0.0
    %625 = vmatmul.mubr.f32.gmra.mxu0 %v553
    %v626 = vpop.f32.mrf.mxu0
    %v627 = vadd.f32 %v547, %v626
    %v628 = vpop.f32.mrf.mxu0
    %629 = vdwg.mxu0
    %v630 = vadd.f32 %v365, %v622
    %v631 = vadd.f32 %v366, %v627
    %v632 = vld [vmem:[%s10] sm:$0xff]
    %v633 = vld [vmem:[%s10 + $0x8] sm:$0xff]
    %v634 = vld [vmem:[%s10 + $0x10] sm:$0xff]
    %v635 = vld [vmem:[%s10 + $0x18] sm:$0xff]
    %v636 = vld [vmem:[%s11] sm:$0x1]
    %v638 = vlaneseq
    %v639 = vshrl.u32 %v638, 7
    %v640 = vsub.s32 0, %v639
    %v641 = vrot.slane %v636, %v640
    %v644 = vsel %vm283, %v630, 0
    %v647 = vsel %vm283, %v631, 0
    %649 = vmatprep.subr.mxu0 0.0
    %650 = vmatpush1.msra.mxu0 0.0
    %651 = vmatprep.subr.mxu0 0.0
    %652 = vmatpush1.msra.mxu0 0.0
    %653 = vmatprep.subr.mxu0 0.0
    %654 = vmatpush1.msra.mxu0 0.0
    %655 = vmatprep.subr.mxu0 0.0
    %656 = vmatpush1.msra.mxu0 0.0
    %657 = vmatprep.subr.mxu0 0.0
    %658 = vmatpush1.msra.mxu0 0.0
    %659 = vmatprep.subr.mxu0 0.0
    %660 = vmatpush1.msra.mxu0 0.0
    %661 = vmatprep.subr.mxu0 0.0
    %662 = vmatpush1.msra.mxu0 0.0
    %663 = vmatprep.subr.mxu0 0.0
    %664 = vmatpush1.msra.mxu0 0.0
    %665 = vmatprep.subr.mxu0 0.0
    %666 = vmatpush1.msra.mxu0 0.0
    %667 = vmatprep.subr.mxu0 0.0
    %668 = vmatpush1.msra.mxu0 0.0
    %669 = vmatprep.subr.mxu0 0.0
    %670 = vmatpush1.msra.mxu0 0.0
    %671 = vmatprep.subr.mxu0 0.0
    %672 = vmatpush1.msra.mxu0 0.0
    %673 = vmatprep.subr.mxu0 0.0
    %674 = vmatpush1.msra.mxu0 %v635
    %675 = vmatprep.subr.mxu0 0.0
    %676 = vmatpush1.msra.mxu0 %v634
    %677 = vmatprep.subr.mxu0 0.0
    %678 = vmatpush1.msra.mxu0 %v633
    %679 = vmatprep.subr.mxu0 0.0
    %680 = vmatpush1.msra.mxu0 %v632
    %681 = vmatprep.subr.mxu0 0.0
    %682 = vmatpush2.msra.mxu0 0.0
    %683 = vmatprep.subr.mxu0 0.0
    %684 = vmatpush2.msra.mxu0 0.0
    %685 = vmatprep.subr.mxu0 0.0
    %686 = vmatpush2.msra.mxu0 0.0
    %687 = vmatprep.subr.mxu0 0.0
    %688 = vmatpush2.msra.mxu0 0.0
    %689 = vmatprep.subr.mxu0 0.0
    %690 = vmatpush2.msra.mxu0 0.0
    %691 = vmatprep.subr.mxu0 0.0
    %692 = vmatpush2.msra.mxu0 0.0
    %693 = vmatprep.subr.mxu0 0.0
    %694 = vmatpush2.msra.mxu0 0.0
    %695 = vmatprep.subr.mxu0 0.0
    %696 = vmatpush2.msra.mxu0 0.0
    %697 = vmatprep.subr.mxu0 0.0
    %698 = vmatpush2.msra.mxu0 0.0
    %699 = vmatprep.subr.mxu0 0.0
    %700 = vmatpush2.msra.mxu0 0.0
    %701 = vmatprep.subr.mxu0 0.0
    %702 = vmatpush2.msra.mxu0 0.0
    %703 = vmatprep.subr.mxu0 0.0
    %704 = vmatpush2.msra.mxu0 0.0
    %705 = vmatprep.subr.mxu0 0.0
    %706 = vmatpush2.msra.mxu0 0.0
    %707 = vmatprep.subr.mxu0 0.0
    %708 = vmatpush2.msra.mxu0 0.0
    %709 = vmatprep.subr.mxu0 0.0
    %710 = vmatpush2.msra.mxu0 0.0
    %711 = vmatprep.subr.mxu0 0.0
    %712 = vmatpush2.msra.mxu0 0.0
    %713 = vmatprep.mubr.f32.mxu0 0.0
    %714 = vmatmul.mubr.f32.gmra.mxu0 %v644
    %v715 = vpop.f32.mrf.mxu0
    %v716 = vadd.f32 %v641, %v715
    %v717 = vpop.f32.mrf.mxu0
    %718 = vmatprep.mubr.f32.mxu0 0.0
    %719 = vmatmul.mubr.f32.gmra.mxu0 %v647
    %v720 = vpop.f32.mrf.mxu0
    %v721 = vadd.f32 %v641, %v720
    %v722 = vpop.f32.mrf.mxu0
    %723 = vdwg.mxu0
    %vm724 = vcmask 31744
    %v725 = vsel %vm724, %v716, -inf
    %726 = vmax.xlane.f32.xlu0 %v725
    %v727 = vpop.xlane.xlu0 %726
    %v728 = vsel %vm724, %v721, -inf
    %729 = vmax.xlane.f32.xlu0 %v728
    %v730 = vpop.xlane.xlu0 %729
    %v731 = vsub.f32 %v716, %v727
    %v732 = vsub.f32 %v721, %v730
    %v733 = vmul.f32 %v731, 1.442695
    %v734 = vpow.pop %v733
    %v735 = vmul.f32 %v732, 1.442695
    %v736 = vpow.pop %v735
    %v737 = vsel %vm724, %v734, 0.0
    %738 = vadd.xlane.f32.xlu0 %v737
    %v739 = vpop.xlane.xlu0 %738
    %v740 = vsel %vm724, %v736, 0.0
    %741 = vadd.xlane.f32.xlu0 %v740
    %v742 = vpop.xlane.xlu0 %741
    %v743 = vlog2.pop %v739
    %v744 = vmul.f32 %v743, 0.6931472
    %v745 = vlog2.pop %v742
    %v746 = vmul.f32 %v745, 0.6931472
    %v747 = vsub.f32 %v731, %v744
    %v748 = vsub.f32 %v732, %v746
    %749 = vst.msk [vmem:[%s12] sm:$0xff] %vm724, %v747
    %750 = vst.msk [vmem:[%s12 + $0x8] sm:$0xff] %vm724, %v748
    // Predicated region
    $region66: #{_gin_lin_skip_pallas.1} parent=1 // pred_check
      _
    $region67: #{_gin_lin_skip_pallas.1} parent=1 // pred_check_branch
      %752 = sbr.rel (0) target = $region69
    $region68: #{_gin_lin_skip_pallas.1} parent=1 // pred_region
      _
    $region69: #{_gin_lin_skip_pallas.1} parent=1 // pred_fallthru
      _
    // Predicated region
    $region70: #{_gin_lin_skip_pallas.1} parent=1 // pred_check
      _
    $region71: #{_gin_lin_skip_pallas.1} parent=1 // pred_check_branch
      %754 = sbr.rel (0) target = $region73
    $region72: #{_gin_lin_skip_pallas.1} parent=1 // pred_region
      _
    $region73: #{_gin_lin_skip_pallas.1} parent=1 // pred_fallthru
      _
    %755 = vsyncpa [#allocation3], 1
    %756 = vsyncpa [#allocation5], 1
    %757 = vsyncpa [#allocation8], 1

</llo_original>
